<compile_context>
chip_gen: v5e
topology: v5e:2x2
jax: 0.10.0
libtpu: 0.0.40
codegen_flags: <defaults>
</compile_context>

<pallas_src>
import functools

import jax
import jax.numpy as jnp
from jax.experimental import pallas as pl
from jax.experimental.pallas import tpu as pltpu

LANE = 128


def _round_up(x, m):
    return (x + m - 1) // m * m


def _pad_last(a, target):
    pad = target - a.shape[-1]
    if pad == 0:
        return a
    return jnp.pad(a, [(0, 0)] * (a.ndim - 1) + [(0, pad)])


def _pad_weight(w, in_pad, out_pad, dtype):
    fin, fout = w.shape
    wp = jnp.zeros((in_pad, out_pad), dtype)
    return wp.at[:fin, :fout].set(w.astype(dtype))


def _pad_bias(b, out_pad):
    fout = b.shape[-1]
    return jnp.zeros((1, out_pad), jnp.float32).at[:, :fout].set(
        b.reshape(1, -1).astype(jnp.float32))


def _pick_tile(n, target):
    """Largest multiple-of-128 divisor of n that is <= target; falls back to n."""
    t = (min(target, n) // LANE) * LANE
    while t >= LANE:
        if n % t == 0:
            return t
        t -= LANE
    return n


def sage_layer_kernel(a_ref, xk_ref, xrow_ref, wself_ref, wneigh_ref, b_ref,
                      o_ref, acc_ref, *, activation):
    """One SAGEConv (mean agg) layer tile.

    Grid = (row tiles i, K tiles k).  Accumulates agg = A[i,:] @ X over k in an
    f32 VMEM scratch, then on the last k step computes
      act( X[i] @ Wself + agg @ Wneigh + b )
    and stores the lane-dense row tile.
    """
    k = pl.program_id(1)

    @pl.when(k == 0)
    def _():
        acc_ref[...] = jnp.zeros_like(acc_ref)

    # mean-neighbor aggregation (A is already row-normalized by 1/deg_in);
    # bf16 operands, f32 accumulation.
    acc_ref[...] += jnp.dot(a_ref[...], xk_ref[...],
                            preferred_element_type=jnp.float32)

    @pl.when(k == pl.num_programs(1) - 1)
    def _():
        # self + neighbor matmuls without any concat (static refs, no VMEM copy)
        h = jnp.dot(xrow_ref[...], wself_ref[...],
                    preferred_element_type=jnp.float32)
        h += jnp.dot(acc_ref[...].astype(wneigh_ref.dtype), wneigh_ref[...],
                     preferred_element_type=jnp.float32)
        h += b_ref[...]
        if activation == "relu":
            h = jnp.maximum(h, 0.0)
        elif activation == "sigmoid":
            h = jax.nn.sigmoid(h)
        o_ref[...] = h.astype(o_ref.dtype)


def sage_layer(a_norm, x, w_self, w_neigh, b, *, activation, out_dtype,
               tm_target=512, tk_target=512):
    n = a_norm.shape[0]
    fin = x.shape[1]          # lane-padded input feature dim
    fout = w_self.shape[1]    # lane-padded output feature dim

    tk = _pick_tile(n, tk_target)
    tm = _pick_tile(n, tm_target)
    # Keep >= 2 row tiles when possible so the "parallel" axis can shard across
    # the 2 TensorCores on v7x.
    if n // tm < 2:
        tm_alt = _pick_tile(n, max(LANE, n // 2))
        if n // tm_alt >= 2:
            tm = tm_alt
    assert n % tm == 0 and n % tk == 0

    a_bytes = jnp.dtype(a_norm.dtype).itemsize
    x_bytes = jnp.dtype(x.dtype).itemsize
    w_bytes = jnp.dtype(w_self.dtype).itemsize
    o_bytes = jnp.dtype(out_dtype).itemsize
    cost = pl.CostEstimate(
        flops=int(2 * n * n * fin + 4 * n * fin * fout),
        transcendentals=int(n * fout) if activation == "sigmoid" else 0,
        bytes_accessed=int(
            n * n * a_bytes                        # A streamed once
            + (n // tm) * n * fin * x_bytes        # X K-slices re-streamed per row tile
            + n * fin * x_bytes                    # X row tiles (self path)
            + 2 * fin * fout * w_bytes             # weights
            + fout * 4                             # bias
            + n * fout * o_bytes),                 # output
    )

    return pl.pallas_call(
        functools.partial(sage_layer_kernel, activation=activation),
        out_shape=jax.ShapeDtypeStruct((n, fout), out_dtype),
        grid_spec=pltpu.PrefetchScalarGridSpec(
            num_scalar_prefetch=0,
            grid=(n // tm, n // tk),
            in_specs=[
                pl.BlockSpec((tm, tk), lambda i, k: (i, k)),       # A row/col tile
                pl.BlockSpec((tk, fin), lambda i, k: (k, 0)),      # X K-slice (agg)
                pl.BlockSpec((tm, fin), lambda i, k: (i, 0)),      # X row tile (self)
                pl.BlockSpec((fin, fout), lambda i, k: (0, 0)),    # W_self
                pl.BlockSpec((fin, fout), lambda i, k: (0, 0)),    # W_neigh
                pl.BlockSpec((1, fout), lambda i, k: (0, 0)),      # bias
            ],
            out_specs=pl.BlockSpec((tm, fout), lambda i, k: (i, 0)),
            scratch_shapes=[pltpu.VMEM((tm, fin), jnp.float32)],   # agg accumulator
        ),
        compiler_params=pltpu.CompilerParams(
            dimension_semantics=("parallel", "arbitrary")),
        cost_estimate=cost,
    )(a_norm, x, x, w_self, w_neigh, b)


def gnn_sage_forward(a_norm, x, ws1, wn1, b1, ws2, wn2, b2):
    n, in_feats = x.shape
    hidden = ws1.shape[1]
    num_classes = ws2.shape[1]

    in_pad = _round_up(in_feats, LANE)
    h_pad = _round_up(hidden, LANE)
    c_pad = _round_up(num_classes, LANE)

    # Cast once in the wrapper: A is the dominant HBM traffic and is read by
    # both layers; features/weights zero-padded to lane-dense dims (padded
    # columns stay 0 pre-activation, and padded class columns are sliced away).
    a_bf = a_norm.astype(jnp.bfloat16)
    x_p = _pad_last(x.astype(jnp.float32), in_pad).astype(jnp.bfloat16)
    ws1p = _pad_weight(ws1, in_pad, h_pad, jnp.bfloat16)
    wn1p = _pad_weight(wn1, in_pad, h_pad, jnp.bfloat16)
    b1p = _pad_bias(b1, h_pad)
    ws2p = _pad_weight(ws2, h_pad, c_pad, jnp.bfloat16)
    wn2p = _pad_weight(wn2, h_pad, c_pad, jnp.bfloat16)
    b2p = _pad_bias(b2, c_pad)

    # layer 1: relu( X @ Ws1 + (A @ X) @ Wn1 + b1 ), emitted in bf16 to halve the
    # h1 HBM writeback and layer-2 re-reads.
    h1 = sage_layer(a_bf, x_p, ws1p, wn1p, b1p,
                    activation="relu", out_dtype=jnp.bfloat16)
    # TODO(synk): nn.Dropout between layers is identity at inference; not emitted.
    # TODO(synk): for small graphs both layers could be fused into one pallas_call
    # with h1 resident in VMEM; kept as two calls for generality.
    h2 = sage_layer(a_bf, h1, ws2p, wn2p, b2p,
                    activation="sigmoid", out_dtype=jnp.float32)
    return h2[:, :num_classes]


def reference_forward(a_norm, x, ws1, wn1, b1, ws2, wn2, b2):
    h1 = jnp.maximum(x @ ws1 + (a_norm @ x) @ wn1 + b1, 0.0)
    h2 = h1 @ ws2 + (a_norm @ h1) @ wn2 + b2
    return jax.nn.sigmoid(h2)


if __name__ == "__main__":
    # Small, module-consistent shapes (N chosen so the (rows, K) grid is at least 2x1).
    N = 256           # number of graph nodes
    IN_FEATS = 16
    HIDDEN = 32
    NUM_CLASSES = 4

    key = jax.random.PRNGKey(0)
    k_adj, k_x, k_ws1, k_wn1, k_ws2, k_wn2 = jax.random.split(key, 6)

    # Deterministic random graph: ~5% edge density, no self loops.
    edge_prob = jax.random.uniform(k_adj, (N, N))
    adj = (edge_prob < 0.05).astype(jnp.float32)
    adj = adj * (1.0 - jnp.eye(N, dtype=jnp.float32))
    deg = adj.sum(axis=1, keepdims=True)                    # per-destination-row degree
    inv_deg = jnp.where(deg > 0, 1.0 / jnp.maximum(deg, 1.0), 0.0)
    a_norm = adj * inv_deg                                  # row-normalized -> mean aggregation

    # Node features.
    x = jax.random.normal(k_x, (N, IN_FEATS), dtype=jnp.float32)

    # SAGEConv parameters (fc_self / fc_neigh + shared bias), stored as [in, out].
    scale1 = 1.0 / jnp.sqrt(IN_FEATS)
    scale2 = 1.0 / jnp.sqrt(HIDDEN)
    ws1 = jax.random.normal(k_ws1, (IN_FEATS, HIDDEN), dtype=jnp.float32) * scale1
    wn1 = jax.random.normal(k_wn1, (IN_FEATS, HIDDEN), dtype=jnp.float32) * scale1
    b1 = jnp.zeros((HIDDEN,), dtype=jnp.float32)
    ws2 = jax.random.normal(k_ws2, (HIDDEN, NUM_CLASSES), dtype=jnp.float32) * scale2
    wn2 = jax.random.normal(k_wn2, (HIDDEN, NUM_CLASSES), dtype=jnp.float32) * scale2
    b2 = jnp.zeros((NUM_CLASSES,), dtype=jnp.float32)

    out = gnn_sage_forward(a_norm, x, ws1, wn1, b1, ws2, wn2, b2)
    out = jax.block_until_ready(out)

    ref = reference_forward(a_norm, x, ws1, wn1, b1, ws2, wn2, b2)
    assert out.shape == (N, NUM_CLASSES)
    # bf16 matmul path: relaxed tolerance vs. the f32 reference.
    assert jnp.allclose(out, ref, atol=2e-2, rtol=2e-2), "mismatch vs pure-JAX reference"

    print("KERNEL_OK")
</pallas_src>

<mosaic_0001>
module attributes {stable_mosaic.version = 11 : i64} {
  func.func @sage_layer_kernel(%arg0: i32, %arg1: i32, %arg2: memref<128x256xbf16, #tpu.memory_space<vmem>>, %arg3: memref<256x128xbf16, #tpu.memory_space<vmem>>, %arg4: memref<128x128xbf16, #tpu.memory_space<vmem>>, %arg5: memref<128x128xbf16, #tpu.memory_space<vmem>>, %arg6: memref<128x128xbf16, #tpu.memory_space<vmem>>, %arg7: memref<1x128xf32, #tpu.memory_space<vmem>>, %arg8: memref<128x128xbf16, #tpu.memory_space<vmem>>, %arg9: memref<128x128xf32, #tpu.memory_space<vmem>>) attributes {dimension_semantics = [#tpu.dimension_semantics<parallel>, #tpu.dimension_semantics<arbitrary>], iteration_bounds = array<i64: 2, 1>, scalar_prefetch = 0 : i64, scratch_operands = 1 : i64, tpu.core_type = #tpu.core_type<tc>, window_params = [{transform_indices = @transform_0, window_bounds = array<i64: 128, 256>}, {transform_indices = @transform_1, window_bounds = array<i64: 256, 128>}, {transform_indices = @transform_2, window_bounds = array<i64: 128, 128>}, {pipeline_mode = #tpu.pipeline_mode<synchronous>, transform_indices = @transform_3, window_bounds = array<i64: 128, 128>}, {pipeline_mode = #tpu.pipeline_mode<synchronous>, transform_indices = @transform_4, window_bounds = array<i64: 128, 128>}, {pipeline_mode = #tpu.pipeline_mode<synchronous>, transform_indices = @transform_5, window_bounds = array<i64: 1, 128>}, {transform_indices = @transform_6, window_bounds = array<i64: 128, 128>}]} {
    %c0_i32 = arith.constant 0 : i32
    %0 = arith.cmpi eq, %arg1, %c0_i32 : i32
    %1 = arith.extui %0 : i1 to i32
    %c0_i32_0 = arith.constant 0 : i32
    %2 = arith.cmpi ne, %1, %c0_i32_0 : i32
    scf.if %2 {
      %cst_10 = arith.constant 0.000000e+00 : f32
      %12 = vector.broadcast %cst_10 : f32 to vector<128x128xf32>
      %c0_11 = arith.constant 0 : index
      %c0_12 = arith.constant 0 : index
      %13 = vector.load %arg9[%c0_11, %c0_12] : memref<128x128xf32, #tpu.memory_space<vmem>>, vector<128x128xf32>
      tpu.vector_store %arg9[%c0_11, %c0_12], %12 {strides = array<i32>} : memref<128x128xf32, #tpu.memory_space<vmem>>, vector<128x128xf32>,
    } else {
    }
    %c0 = arith.constant 0 : index
    %c0_1 = arith.constant 0 : index
    %3 = vector.load %arg9[%c0, %c0_1] : memref<128x128xf32, #tpu.memory_space<vmem>>, vector<128x128xf32>
    %c0_2 = arith.constant 0 : index
    %c0_3 = arith.constant 0 : index
    %4 = vector.load %arg2[%c0_2, %c0_3] : memref<128x256xbf16, #tpu.memory_space<vmem>>, vector<128x256xbf16>
    %c0_4 = arith.constant 0 : index
    %c0_5 = arith.constant 0 : index
    %5 = vector.load %arg3[%c0_4, %c0_5] : memref<256x128xbf16, #tpu.memory_space<vmem>>, vector<256x128xbf16>
    %cst = arith.constant dense<0.000000e+00> : vector<128x128xf32>
    %6 = tpu.matmul %4, %5, %cst {dimension_numbers = #tpu.dot_dimension_numbers<[1], [0], [0], [1], [0, 0, 1, 1], [], []>} : vector<128x256xbf16>, vector<256x128xbf16>, vector<128x128xf32> -> vector<128x128xf32>
    %7 = arith.addf %3, %6 : vector<128x128xf32>
    %c0_6 = arith.constant 0 : index
    %c0_7 = arith.constant 0 : index
    %8 = vector.load %arg9[%c0_6, %c0_7] : memref<128x128xf32, #tpu.memory_space<vmem>>, vector<128x128xf32>
    tpu.vector_store %arg9[%c0_6, %c0_7], %7 {strides = array<i32>} : memref<128x128xf32, #tpu.memory_space<vmem>>, vector<128x128xf32>,
    %c0_i32_8 = arith.constant 0 : i32
    %9 = arith.cmpi eq, %arg1, %c0_i32_8 : i32
    %10 = arith.extui %9 : i1 to i32
    %c0_i32_9 = arith.constant 0 : i32
    %11 = arith.cmpi ne, %10, %c0_i32_9 : i32
    scf.if %11 {
      %c0_10 = arith.constant 0 : index
      %c0_11 = arith.constant 0 : index
      %12 = vector.load %arg4[%c0_10, %c0_11] : memref<128x128xbf16, #tpu.memory_space<vmem>>, vector<128x128xbf16>
      %c0_12 = arith.constant 0 : index
      %c0_13 = arith.constant 0 : index
      %13 = vector.load %arg5[%c0_12, %c0_13] : memref<128x128xbf16, #tpu.memory_space<vmem>>, vector<128x128xbf16>
      %cst_14 = arith.constant dense<0.000000e+00> : vector<128x128xf32>
      %14 = tpu.matmul %12, %13, %cst_14 {dimension_numbers = #tpu.dot_dimension_numbers<[1], [0], [0], [1], [0, 0, 1, 1], [], []>} : vector<128x128xbf16>, vector<128x128xbf16>, vector<128x128xf32> -> vector<128x128xf32>
      %c0_15 = arith.constant 0 : index
      %c0_16 = arith.constant 0 : index
      %15 = vector.load %arg9[%c0_15, %c0_16] : memref<128x128xf32, #tpu.memory_space<vmem>>, vector<128x128xf32>
      %16 = arith.truncf %15 : vector<128x128xf32> to vector<128x128xbf16>
      %c0_17 = arith.constant 0 : index
      %c0_18 = arith.constant 0 : index
      %17 = vector.load %arg6[%c0_17, %c0_18] : memref<128x128xbf16, #tpu.memory_space<vmem>>, vector<128x128xbf16>
      %cst_19 = arith.constant dense<0.000000e+00> : vector<128x128xf32>
      %18 = tpu.matmul %16, %17, %cst_19 {dimension_numbers = #tpu.dot_dimension_numbers<[1], [0], [0], [1], [0, 0, 1, 1], [], []>} : vector<128x128xbf16>, vector<128x128xbf16>, vector<128x128xf32> -> vector<128x128xf32>
      %19 = arith.addf %14, %18 : vector<128x128xf32>
      %c0_20 = arith.constant 0 : index
      %c0_21 = arith.constant 0 : index
      %20 = vector.load %arg7[%c0_20, %c0_21] : memref<1x128xf32, #tpu.memory_space<vmem>>, vector<1x128xf32>
      %21 = vector.broadcast %20 : vector<1x128xf32> to vector<128x128xf32>
      %22 = arith.addf %19, %21 : vector<128x128xf32>
      %cst_22 = arith.constant 0.000000e+00 : f32
      %23 = vector.broadcast %cst_22 : f32 to vector<128x128xf32>
      %24 = arith.maximumf %22, %23 : vector<128x128xf32>
      %25 = arith.truncf %24 : vector<128x128xf32> to vector<128x128xbf16>
      %c0_23 = arith.constant 0 : index
      %c0_24 = arith.constant 0 : index
      %26 = vector.load %arg8[%c0_23, %c0_24] : memref<128x128xbf16, #tpu.memory_space<vmem>>, vector<128x128xbf16>
      tpu.vector_store %arg8[%c0_23, %c0_24], %25 {strides = array<i32>} : memref<128x128xbf16, #tpu.memory_space<vmem>>, vector<128x128xbf16>,
    } else {
    }
    return
  }
  func.func @transform_0(%arg0: i32, %arg1: i32) -> (i32, i32) {
    %c0_i32 = arith.constant 0 : i32
    return %arg0, %arg1 : i32, i32
  }
  func.func @transform_1(%arg0: i32, %arg1: i32) -> (i32, i32) {
    %c0_i32 = arith.constant 0 : i32
    %c0_i32_0 = arith.constant 0 : i32
    return %arg1, %c0_i32 : i32, i32
  }
  func.func @transform_2(%arg0: i32, %arg1: i32) -> (i32, i32) {
    %c0_i32 = arith.constant 0 : i32
    %c0_i32_0 = arith.constant 0 : i32
    return %arg0, %c0_i32 : i32, i32
  }
  func.func @transform_3(%arg0: i32, %arg1: i32) -> (i32, i32) {
    %c0_i32 = arith.constant 0 : i32
    %c0_i32_0 = arith.constant 0 : i32
    %c0_i32_1 = arith.constant 0 : i32
    return %c0_i32, %c0_i32_0 : i32, i32
  }
  func.func @transform_4(%arg0: i32, %arg1: i32) -> (i32, i32) {
    %c0_i32 = arith.constant 0 : i32
    %c0_i32_0 = arith.constant 0 : i32
    %c0_i32_1 = arith.constant 0 : i32
    return %c0_i32, %c0_i32_0 : i32, i32
  }
  func.func @transform_5(%arg0: i32, %arg1: i32) -> (i32, i32) {
    %c0_i32 = arith.constant 0 : i32
    %c0_i32_0 = arith.constant 0 : i32
    %c0_i32_1 = arith.constant 0 : i32
    return %c0_i32, %c0_i32_0 : i32, i32
  }
  func.func @transform_6(%arg0: i32, %arg1: i32) -> (i32, i32) {
    %c0_i32 = arith.constant 0 : i32
    %c0_i32_0 = arith.constant 0 : i32
    return %arg0, %c0_i32 : i32, i32
  }
}

</mosaic_0001>

<llo_original>
// kernel: tpu_custom_call.1
$region0: #{tpu_custom_call.1}
  #allocation0 [shape = 'u32[]', space=smem, size = 0x4, offset = 0x4, fixed_abs, tag = 'smem constant byte address 0x4 - core index']
  #allocation1 [shape = 'u32[72,128]{1,0:T(1,128)}', space=vmem, size = 0x9000, scoped, tag = 'internal scratch']
  #allocation2 [shape = 'f32[128,128]{1,0:T(8,128)}', space=vmem, size = 0x10000, scoped, tag = 'scratch operand']
  %s0 = inlined_call_operand.hbm [shape: bf16[256,256], index: 0, kind: input, shape index: {}]
  %s1 = inlined_call_operand.hbm [shape: bf16[256,128], index: 1, kind: input, shape index: {}]
  %s2 = inlined_call_operand.hbm [shape: bf16[256,128], index: 2, kind: input, shape index: {}]
  %s3 = inlined_call_operand.hbm [shape: bf16[128,128], index: 3, kind: input, shape index: {}]
  %s4 = inlined_call_operand.hbm [shape: bf16[128,128], index: 4, kind: input, shape index: {}]
  %s5 = inlined_call_operand.vmem [shape: f32[1,128], index: 5, kind: input, shape index: {}]
  %s6 = inlined_call_operand.hbm [shape: bf16[256,128], index: 6, kind: output, shape index: {}]
  %s7 = sld [smem:[#allocation0]]
  $region85: #{tpu_custom_call.1} parent=0
    _
  %s9 = ssub.s32 1, %s7
  %s10 = scalar_select 0, %s9, %s7
  $region1: #{tpu_custom_call.1} parent=0
    #allocation3 [shape = 'u8[131072]{0}', space=vmem, size = 0x20000, scoped, tag = 'input window, operand 0']
    #allocation4 [shape = 's32[2]{0}', space=sflag, size = 0x8, scoped, tag = 'scoped memory for tpu_custom_call.1']
    #allocation5 [shape = 's32[2]{0}', space=sflag, size = 0x8, scoped, tag = 'scoped memory for tpu_custom_call.1']
    #allocation6 [shape = 'u8[65536]{0}', space=vmem, size = 0x10000, scoped, tag = 'input window, operand 1, single buffered']
    #allocation7 [shape = 's32[1]{0}', space=sflag, size = 0x4, scoped, tag = 'scoped memory for tpu_custom_call.1']
    #allocation8 [shape = 'u8[65536]{0}', space=vmem, size = 0x10000, scoped, tag = 'input window, operand 2']
    #allocation9 [shape = 'u8[32768]{0}', space=vmem, size = 0x8000, scoped, tag = 'input window, operand 3, single buffered']
    #allocation10 [shape = 'u8[32768]{0}', space=vmem, size = 0x8000, scoped, tag = 'input window, operand 4, single buffered']
    #allocation11 [shape = 's32[1]{0}', space=sflag, size = 0x4, scoped, tag = 'scoped memory for tpu_custom_call.1']
    #allocation12 [shape = 'u8[65536]{0}', space=vmem, size = 0x10000, scoped, tag = 'output window, operand 0']
    %11 = vsyncpa [#allocation4], 0
    %s12 = scalar_lea.sflag [#allocation4], 1
    %13 = vsyncpa %s12, 0
    %14 = vsyncpa [#allocation7], 0
    %15 = vsyncpa [#allocation11], 0
    %16 = vsyncpa [#allocation5], 0
    %s17 = scalar_lea.sflag [#allocation5], 1
    %18 = vsyncpa %s17, 0
    loop: start=0, step=1, limit=4
    $region2: #{tpu_custom_call.1} parent=1 // loop_pre_header
      _
    $region3: #{tpu_custom_call.1} parent=1 // loop_header
      %s20 = sphi 0, %s24
      %p21 = scmp.ge.s32.totalorder %s20, 4
      %s27 = sphi 0, %s39
      %s28 = sphi 0, %s35
      %s29 = sphi 0, %s27
      %s30 = sphi 0, %s28
      %s31 = sphi 0, %s29
      %s32 = sphi 0, %s30
      %s44 = sphi 0, %s46
      %s47 = sphi 0, %s44
      %s48 = sphi 0, %s47
      %s64 = sphi 0, %s48
      %s70 = sphi 0, %s72
      %s73 = sphi 0, %s70
      %s74 = sphi 0, %s73
      %s90 = sphi 0, %s74
      %s96 = sphi 0, %s98
      %s99 = sphi 0, %s96
      %s100 = sphi 0, %s99
      %s116 = sphi 0, %s100
      %s120 = sphi 0, %s120
      %s122 = sphi 0, %s120
      %s123 = sphi 0, %s122
      %s137 = sphi 0, %s123
      %s141 = sphi 0, %s141
      %s143 = sphi 0, %s141
      %s144 = sphi 0, %s143
      %s158 = sphi 0, %s144
      %s162 = sphi 0, %s162
      %s164 = sphi 0, %s162
      %s165 = sphi 0, %s164
      %s179 = sphi 0, %s165
      %s185 = sphi 0, %s187
      %s188 = sphi 0, %s185
      %s189 = sphi 0, %s188
      %s205 = sphi 0, %s189
    $region4: #{tpu_custom_call.1} parent=1 // loop_header_branch
      %23 = sbr.rel (%p21) target = $region8
    $region5: #{tpu_custom_call.1} parent=1 // loop_body
      %s25 = ssub.s32 %s20, 1
      %s26 = ssub.s32 %s20, 2
      %s33 = sadd.s32 1, %s28
      %p34 = scmp.ge.s32.totalorder %s33, 1
      %s35 = scalar_select %p34, 0, %s33
      %s36 = sadd.s32 1, %s27
      %s37 = scalar_select %p34, %s36, %s27
      %p38 = scmp.ge.s32.totalorder %s37, 2
      %s39 = scalar_select %p38, 0, %s37
      %s40 = ssub.s32 %s27, %s39
      %s41 = ssub.s32 %s28, %s35
      %s42 = sor.u32 %s40, %s41
      %p43 = scmp.eq.s32.totalorder %s42, 0
      %s45 = sadd.s32 %s44, 1
      %s46 = scalar_select %p43, %s44, %s45
      %p49 = pneg %p43
      %p50 = scmp.eq.s32.totalorder %s20, 1
      %p51 = por %p49, %p50
      %p52 = scmp.ne.s32.totalorder %s44, %s47
      %p53 = scmp.eq.s32.totalorder %s20, 0
      %p54 = por %p52, %p53
      %p55 = scmp.ne.s32.totalorder %s44, %s47
      %p56 = scmp.eq.s32.totalorder %s25, 1
      %p57 = por %p55, %p56
      %p58 = scmp.ne.s32.totalorder %s47, %s48
      %p59 = scmp.eq.s32.totalorder %s25, 0
      %p60 = por %p58, %p59
      %p61 = scmp.ne.s32.totalorder %s47, %s48
      %p62 = scmp.eq.s32.totalorder %s26, 1
      %p63 = por %p61, %p62
      %p65 = scmp.ne.s32.totalorder %s48, %s64
      %p66 = scmp.eq.s32.totalorder %s26, 0
      %p67 = por %p65, %p66
      %s68 = ssub.s32 %s28, %s35
      %p69 = scmp.eq.s32.totalorder %s68, 0
      %s71 = sadd.s32 %s70, 1
      %s72 = scalar_select %p69, %s70, %s71
      %p75 = pneg %p69
      %p76 = scmp.eq.s32.totalorder %s20, 1
      %p77 = por %p75, %p76
      %p78 = scmp.ne.s32.totalorder %s70, %s73
      %p79 = scmp.eq.s32.totalorder %s20, 0
      %p80 = por %p78, %p79
      %p81 = scmp.ne.s32.totalorder %s70, %s73
      %p82 = scmp.eq.s32.totalorder %s25, 1
      %p83 = por %p81, %p82
      %p84 = scmp.ne.s32.totalorder %s73, %s74
      %p85 = scmp.eq.s32.totalorder %s25, 0
      %p86 = por %p84, %p85
      %p87 = scmp.ne.s32.totalorder %s73, %s74
      %p88 = scmp.eq.s32.totalorder %s26, 1
      %p89 = por %p87, %p88
      %p91 = scmp.ne.s32.totalorder %s74, %s90
      %p92 = scmp.eq.s32.totalorder %s26, 0
      %p93 = por %p91, %p92
      %s94 = ssub.s32 %s27, %s39
      %p95 = scmp.eq.s32.totalorder %s94, 0
      %s97 = sadd.s32 %s96, 1
      %s98 = scalar_select %p95, %s96, %s97
      %p101 = pneg %p95
      %p102 = scmp.eq.s32.totalorder %s20, 1
      %p103 = por %p101, %p102
      %p104 = scmp.ne.s32.totalorder %s96, %s99
      %p105 = scmp.eq.s32.totalorder %s20, 0
      %p106 = por %p104, %p105
      %p107 = scmp.ne.s32.totalorder %s96, %s99
      %p108 = scmp.eq.s32.totalorder %s25, 1
      %p109 = por %p107, %p108
      %p110 = scmp.ne.s32.totalorder %s99, %s100
      %p111 = scmp.eq.s32.totalorder %s25, 0
      %p112 = por %p110, %p111
      %p113 = scmp.ne.s32.totalorder %s99, %s100
      %p114 = scmp.eq.s32.totalorder %s26, 1
      %p115 = por %p113, %p114
      %p117 = scmp.ne.s32.totalorder %s100, %s116
      %p118 = scmp.eq.s32.totalorder %s26, 0
      %p119 = por %p117, %p118
      %s121 = sadd.s32 %s120, 1
      %p124 = scmp.eq.s32.totalorder %s20, 1
      %p125 = scmp.ne.s32.totalorder %s120, %s122
      %p126 = scmp.eq.s32.totalorder %s20, 0
      %p127 = por %p125, %p126
      %p128 = scmp.ne.s32.totalorder %s120, %s122
      %p129 = scmp.eq.s32.totalorder %s25, 1
      %p130 = por %p128, %p129
      %p131 = scmp.ne.s32.totalorder %s122, %s123
      %p132 = scmp.eq.s32.totalorder %s25, 0
      %p133 = por %p131, %p132
      %p134 = scmp.ne.s32.totalorder %s122, %s123
      %p135 = scmp.eq.s32.totalorder %s26, 1
      %p136 = por %p134, %p135
      %p138 = scmp.ne.s32.totalorder %s123, %s137
      %p139 = scmp.eq.s32.totalorder %s26, 0
      %p140 = por %p138, %p139
      %s142 = sadd.s32 %s141, 1
      %p145 = scmp.eq.s32.totalorder %s20, 1
      %p146 = scmp.ne.s32.totalorder %s141, %s143
      %p147 = scmp.eq.s32.totalorder %s20, 0
      %p148 = por %p146, %p147
      %p149 = scmp.ne.s32.totalorder %s141, %s143
      %p150 = scmp.eq.s32.totalorder %s25, 1
      %p151 = por %p149, %p150
      %p152 = scmp.ne.s32.totalorder %s143, %s144
      %p153 = scmp.eq.s32.totalorder %s25, 0
      %p154 = por %p152, %p153
      %p155 = scmp.ne.s32.totalorder %s143, %s144
      %p156 = scmp.eq.s32.totalorder %s26, 1
      %p157 = por %p155, %p156
      %p159 = scmp.ne.s32.totalorder %s144, %s158
      %p160 = scmp.eq.s32.totalorder %s26, 0
      %p161 = por %p159, %p160
      %s163 = sadd.s32 %s162, 1
      %p166 = scmp.eq.s32.totalorder %s20, 1
      %p167 = scmp.ne.s32.totalorder %s162, %s164
      %p168 = scmp.eq.s32.totalorder %s20, 0
      %p169 = por %p167, %p168
      %p170 = scmp.ne.s32.totalorder %s162, %s164
      %p171 = scmp.eq.s32.totalorder %s25, 1
      %p172 = por %p170, %p171
      %p173 = scmp.ne.s32.totalorder %s164, %s165
      %p174 = scmp.eq.s32.totalorder %s25, 0
      %p175 = por %p173, %p174
      %p176 = scmp.ne.s32.totalorder %s164, %s165
      %p177 = scmp.eq.s32.totalorder %s26, 1
      %p178 = por %p176, %p177
      %p180 = scmp.ne.s32.totalorder %s165, %s179
      %p181 = scmp.eq.s32.totalorder %s26, 0
      %p182 = por %p180, %p181
      %s183 = ssub.s32 %s27, %s39
      %p184 = scmp.eq.s32.totalorder %s183, 0
      %s186 = sadd.s32 %s185, 1
      %s187 = scalar_select %p184, %s185, %s186
      %p190 = pneg %p184
      %p191 = scmp.eq.s32.totalorder %s20, 1
      %p192 = por %p190, %p191
      %p193 = scmp.ne.s32.totalorder %s185, %s188
      %p194 = scmp.eq.s32.totalorder %s20, 0
      %p195 = por %p193, %p194
      %p196 = scmp.ne.s32.totalorder %s185, %s188
      %p197 = scmp.eq.s32.totalorder %s25, 1
      %p198 = por %p196, %p197
      %p199 = scmp.ne.s32.totalorder %s188, %s189
      %p200 = scmp.eq.s32.totalorder %s25, 0
      %p201 = por %p199, %p200
      %p202 = scmp.ne.s32.totalorder %s188, %s189
      %p203 = scmp.eq.s32.totalorder %s26, 1
      %p204 = por %p202, %p203
      %p206 = scmp.ne.s32.totalorder %s189, %s205
      %p207 = scmp.eq.s32.totalorder %s26, 0
      %p208 = por %p206, %p207
      %p209 = scmp.le.s32.totalorder 1, %s20
      %p210 = scmp.lt.s32.totalorder %s20, 3
      %p211 = pnand %p209, %p210
      %p212 = pneg %p211
      // Predicated region
      $region9: #{tpu_custom_call.1} parent=5 // pred_check
        _
      $region10: #{tpu_custom_call.1} parent=5 // pred_check_branch
        %214 = sbr.rel (%p211) target = $region12
      $region11: #{tpu_custom_call.1} parent=5 // pred_region
        %s215 = ssub.s32 %s20, 1
        // Predicated region
        $region13: #{tpu_custom_call.1} parent=11 // pred_check
          %p216 = pneg %p86
        $region14: #{tpu_custom_call.1} parent=11 // pred_check_branch
          %218 = sbr.rel (%p216) target = $region16
        $region15: #{tpu_custom_call.1} parent=11 // pred_region
          %s219 = smul.u32 32, %s30
          %221 = vsyncadd [#allocation7], 0
          %s222 = smul.addr %s219, 4
          %s223 = scalar_lea.hbm %s1, %s222
          %s224 = sshll.u32 %s223, 4
          %s225 = int_to_ptr.hbm [resolvable:$true] %s224
          %s226 = sshll.u32 [#allocation6], 4
          %s227 = int_to_ptr.vmem [resolvable:$true] %s226
          %232 = dma.hbm_to_vmem [thread:$0]  %s225, 2048, %s227, [#allocation7], 64, 64, 4
        $region16: #{tpu_custom_call.1} parent=11 // pred_fallthru
          _
        // Predicated region
        $region17: #{tpu_custom_call.1} parent=11 // pred_check
          %p233 = pneg %p133
        $region18: #{tpu_custom_call.1} parent=11 // pred_check_branch
          %235 = sbr.rel (%p233) target = $region20
        $region19: #{tpu_custom_call.1} parent=11 // pred_region
          %237 = vsyncadd [#allocation7], 0
          %s238 = sshll.u32 %s3, 4
          %s239 = int_to_ptr.hbm [resolvable:$true] %s238
          %s240 = sshll.u32 [#allocation9], 4
          %s241 = int_to_ptr.vmem [resolvable:$true] %s240
          %246 = dma.hbm_to_vmem [thread:$0]  %s239, 1024, %s241, [#allocation7], 64, 64, 4
        $region20: #{tpu_custom_call.1} parent=11 // pred_fallthru
          _
        // Predicated region
        $region21: #{tpu_custom_call.1} parent=11 // pred_check
          %p247 = pneg %p154
        $region22: #{tpu_custom_call.1} parent=11 // pred_check_branch
          %249 = sbr.rel (%p247) target = $region24
        $region23: #{tpu_custom_call.1} parent=11 // pred_region
          %251 = vsyncadd [#allocation11], 0
          %s252 = sshll.u32 %s4, 4
          %s253 = int_to_ptr.hbm [resolvable:$true] %s252
          %s254 = sshll.u32 [#allocation10], 4
          %s255 = int_to_ptr.vmem [resolvable:$true] %s254
          %260 = dma.hbm_to_vmem [thread:$0]  %s253, 1024, %s255, [#allocation11], 64, 64, 4
        $region24: #{tpu_custom_call.1} parent=11 // pred_fallthru
          _
        // Predicated region
        $region25: #{tpu_custom_call.1} parent=11 // pred_check
          %p261 = pneg %p175
        $region26: #{tpu_custom_call.1} parent=11 // pred_check_branch
          %263 = sbr.rel (%p261) target = $region28
        $region27: #{tpu_custom_call.1} parent=11 // pred_region
          _
        $region28: #{tpu_custom_call.1} parent=11 // pred_fallthru
          _
      $region12: #{tpu_custom_call.1} parent=5 // pred_fallthru
        _
      %p264 = scmp.lt.s32.totalorder %s20, 2
      // Predicated region
      $region29: #{tpu_custom_call.1} parent=5 // pred_check
        %p265 = pneg %p264
      $region30: #{tpu_custom_call.1} parent=5 // pred_check_branch
        %267 = sbr.rel (%p265) target = $region32
      $region31: #{tpu_custom_call.1} parent=5 // pred_region
        // Predicated region
        $region33: #{tpu_custom_call.1} parent=31 // pred_check
          %p268 = pneg %p54
        $region34: #{tpu_custom_call.1} parent=31 // pred_check_branch
          %270 = sbr.rel (%p268) target = $region36
        $region35: #{tpu_custom_call.1} parent=31 // pred_region
          %s271 = sand.u32 %s20, 1
          %s272 = scalar_lea.sflag [#allocation4], %s271
          %s273 = sand.u32 %s44, 1
          %s274 = smul.addr %s273, 128
          %s275 = scalar_lea.vmem [#allocation3], %s274
          %s276 = smul.u32 16, %s27
          %s277 = smul.u32 2, %s28
          %279 = vsyncadd %s272, 0
          %s280 = smul.addr %s276, 2
          %s281 = sadd.s32 %s277, %s280
          %s282 = smul.addr %s281, 4
          %s283 = scalar_lea.hbm %s0, %s282
          %s284 = sshll.u32 %s283, 4
          %s285 = int_to_ptr.hbm [resolvable:$true] %s284
          %s286 = sshll.u32 %s275, 4
          %s287 = int_to_ptr.vmem [resolvable:$true] %s286
          %292 = dma.hbm_to_vmem [thread:$0]  %s285, 2048, %s287, %s272, 128, 128, 8
        $region36: #{tpu_custom_call.1} parent=31 // pred_fallthru
          _
        // Predicated region
        $region37: #{tpu_custom_call.1} parent=31 // pred_check
          %p293 = pneg %p106
        $region38: #{tpu_custom_call.1} parent=31 // pred_check_branch
          %295 = sbr.rel (%p293) target = $region40
        $region39: #{tpu_custom_call.1} parent=31 // pred_region
          %s296 = sand.u32 %s20, 1
          %s297 = scalar_lea.sflag [#allocation4], %s296
          %s298 = sand.u32 %s96, 1
          %s299 = smul.addr %s298, 64
          %s300 = scalar_lea.vmem [#allocation8], %s299
          %s301 = smul.u32 16, %s27
          %303 = vsyncadd %s297, 0
          %s304 = smul.addr %s301, 4
          %s305 = scalar_lea.hbm %s2, %s304
          %s306 = sshll.u32 %s305, 4
          %s307 = int_to_ptr.hbm [resolvable:$true] %s306
          %s308 = sshll.u32 %s300, 4
          %s309 = int_to_ptr.vmem [resolvable:$true] %s308
          %314 = dma.hbm_to_vmem [thread:$0]  %s307, 1024, %s309, %s297, 64, 64, 4
        $region40: #{tpu_custom_call.1} parent=31 // pred_fallthru
          _
      $region32: #{tpu_custom_call.1} parent=5 // pred_fallthru
        _
      %p315 = scmp.le.s32.totalorder 1, %s20
      %p316 = scmp.lt.s32.totalorder %s20, 3
      %p317 = pnand %p315, %p316
      %p318 = pneg %p317
      // Predicated region
      $region41: #{tpu_custom_call.1} parent=5 // pred_check
        _
      $region42: #{tpu_custom_call.1} parent=5 // pred_check_branch
        %320 = sbr.rel (%p317) target = $region44
      $region43: #{tpu_custom_call.1} parent=5 // pred_region
        %s321 = ssub.s32 %s20, 1
        %s322 = sand.u32 %s25, 1
        %s323 = scalar_lea.sflag [#allocation4], %s322
        %s324 = sand.u32 %s47, 1
        %s325 = smul.addr %s324, 128
        %s326 = scalar_lea.vmem [#allocation3], %s325
        // Predicated region
        $region45: #{tpu_custom_call.1} parent=43 // pred_check
          %p327 = pneg %p60
        $region46: #{tpu_custom_call.1} parent=43 // pred_check_branch
          %329 = sbr.rel (%p327) target = $region48
        $region47: #{tpu_custom_call.1} parent=43 // pred_region
          %331 = dma.done %s323, 2048
        $region48: #{tpu_custom_call.1} parent=43 // pred_fallthru
          _
        // Predicated region
        $region49: #{tpu_custom_call.1} parent=43 // pred_check
          %p332 = pneg %p86
        $region50: #{tpu_custom_call.1} parent=43 // pred_check_branch
          %334 = sbr.rel (%p332) target = $region52
        $region51: #{tpu_custom_call.1} parent=43 // pred_region
          %336 = dma.done [#allocation7], 2048
        $region52: #{tpu_custom_call.1} parent=43 // pred_fallthru
          _
        %s337 = sand.u32 %s25, 1
        %s338 = scalar_lea.sflag [#allocation4], %s337
        %s339 = sand.u32 %s99, 1
        %s340 = smul.addr %s339, 64
        %s341 = scalar_lea.vmem [#allocation8], %s340
        // Predicated region
        $region53: #{tpu_custom_call.1} parent=43 // pred_check
          %p342 = pneg %p112
        $region54: #{tpu_custom_call.1} parent=43 // pred_check_branch
          %344 = sbr.rel (%p342) target = $region56
        $region55: #{tpu_custom_call.1} parent=43 // pred_region
          %346 = dma.done %s338, 1024
        $region56: #{tpu_custom_call.1} parent=43 // pred_fallthru
          _
        // Predicated region
        $region57: #{tpu_custom_call.1} parent=43 // pred_check
          %p347 = pneg %p133
        $region58: #{tpu_custom_call.1} parent=43 // pred_check_branch
          %349 = sbr.rel (%p347) target = $region60
        $region59: #{tpu_custom_call.1} parent=43 // pred_region
          %351 = dma.done [#allocation7], 1024
        $region60: #{tpu_custom_call.1} parent=43 // pred_fallthru
          _
        // Predicated region
        $region61: #{tpu_custom_call.1} parent=43 // pred_check
          %p352 = pneg %p154
        $region62: #{tpu_custom_call.1} parent=43 // pred_check_branch
          %354 = sbr.rel (%p352) target = $region64
        $region63: #{tpu_custom_call.1} parent=43 // pred_region
          %356 = dma.done [#allocation11], 1024
        $region64: #{tpu_custom_call.1} parent=43 // pred_fallthru
          _
        %s357 = sand.u32 %s25, 1
        %s358 = scalar_lea.sflag [#allocation4], %s357
        %s359 = sand.u32 %s47, 1
        %s360 = smul.addr %s359, 128
        %s361 = scalar_lea.vmem [#allocation3], %s360
        %p362 = pneg %p60
        %p363 = pneg %p57
        %p364 = pneg %p86
        %p365 = pneg %p83
        %s366 = sand.u32 %s25, 1
        %s367 = scalar_lea.sflag [#allocation4], %s366
        %s368 = sand.u32 %s99, 1
        %s369 = smul.addr %s368, 64
        %s370 = scalar_lea.vmem [#allocation8], %s369
        %p371 = pneg %p112
        %p372 = pneg %p109
        %p373 = pneg %p133
        %p374 = pneg %p130
        %p375 = pneg %p154
        %p376 = pneg %p151
        %p377 = pneg %p175
        %p378 = pneg %p172
        %p379 = pneg %p201
        %p380 = pneg %p198
        %s381 = sand.u32 %s188, 1
        %s382 = scalar_lea.sflag [#allocation5], %s381
        %s383 = sand.u32 %s188, 1
        %s384 = smul.addr %s383, 64
        %s385 = scalar_lea.vmem [#allocation12], %s384
        %s386 = smul.u32 16, %s29
        %s387 = smul.u32 2, %s30
        %s388 = smul.u32 32, %s30
        %s389 = smul.u32 16, %s29
        %s390 = smul.u32 16, %s29
        %p391 = scmp.eq.s32.totalorder %s30, 0
        // Predicated region
        $region65: #{tpu_custom_call.1} parent=43 // pred_check
          %p392 = pneg %p391
        $region66: #{tpu_custom_call.1} parent=43 // pred_check_branch
          %394 = sbr.rel (%p392) target = $region68
        $region67: #{tpu_custom_call.1} parent=43 // pred_region
          %395 = vst [vmem:[#allocation2] sm:$0xff] 0.0
          %396 = vst [vmem:[#allocation2 + $0x8] sm:$0xff] 0.0
          %397 = vst [vmem:[#allocation2 + $0x10] sm:$0xff] 0.0
          %398 = vst [vmem:[#allocation2 + $0x18] sm:$0xff] 0.0
          %399 = vst [vmem:[#allocation2 + $0x20] sm:$0xff] 0.0
          %400 = vst [vmem:[#allocation2 + $0x28] sm:$0xff] 0.0
          %401 = vst [vmem:[#allocation2 + $0x30] sm:$0xff] 0.0
          %402 = vst [vmem:[#allocation2 + $0x38] sm:$0xff] 0.0
          %403 = vst [vmem:[#allocation2 + $0x40] sm:$0xff] 0.0
          %404 = vst [vmem:[#allocation2 + $0x48] sm:$0xff] 0.0
          %405 = vst [vmem:[#allocation2 + $0x50] sm:$0xff] 0.0
          %406 = vst [vmem:[#allocation2 + $0x58] sm:$0xff] 0.0
          %407 = vst [vmem:[#allocation2 + $0x60] sm:$0xff] 0.0
          %408 = vst [vmem:[#allocation2 + $0x68] sm:$0xff] 0.0
          %409 = vst [vmem:[#allocation2 + $0x70] sm:$0xff] 0.0
          %410 = vst [vmem:[#allocation2 + $0x78] sm:$0xff] 0.0
        $region68: #{tpu_custom_call.1} parent=43 // pred_fallthru
          _
        %v411 = vld [vmem:[#allocation2] sm:$0xff]
        %v412 = vld [vmem:[#allocation2 + $0x8] sm:$0xff]
        %v413 = vld [vmem:[#allocation2 + $0x10] sm:$0xff]
        %v414 = vld [vmem:[#allocation2 + $0x18] sm:$0xff]
        %v415 = vld [vmem:[#allocation2 + $0x20] sm:$0xff]
        %v416 = vld [vmem:[#allocation2 + $0x28] sm:$0xff]
        %v417 = vld [vmem:[#allocation2 + $0x30] sm:$0xff]
        %v418 = vld [vmem:[#allocation2 + $0x38] sm:$0xff]
        %v419 = vld [vmem:[#allocation2 + $0x40] sm:$0xff]
        %v420 = vld [vmem:[#allocation2 + $0x48] sm:$0xff]
        %v421 = vld [vmem:[#allocation2 + $0x50] sm:$0xff]
        %v422 = vld [vmem:[#allocation2 + $0x58] sm:$0xff]
        %v423 = vld [vmem:[#allocation2 + $0x60] sm:$0xff]
        %v424 = vld [vmem:[#allocation2 + $0x68] sm:$0xff]
        %v425 = vld [vmem:[#allocation2 + $0x70] sm:$0xff]
        %v426 = vld [vmem:[#allocation2 + $0x78] sm:$0xff]
        %v427 = vld [vmem:[%s326] sm:$0xff]
        %v428 = vld [vmem:[%s326 + $0x8] sm:$0xff]
        %v429 = vld [vmem:[%s326 + $0x10] sm:$0xff]
        %v430 = vld [vmem:[%s326 + $0x18] sm:$0xff]
        %v431 = vld [vmem:[%s326 + $0x20] sm:$0xff]
        %v432 = vld [vmem:[%s326 + $0x28] sm:$0xff]
        %v433 = vld [vmem:[%s326 + $0x30] sm:$0xff]
        %v434 = vld [vmem:[%s326 + $0x38] sm:$0xff]
        %v435 = vld [vmem:[%s326 + $0x40] sm:$0xff]
        %v436 = vld [vmem:[%s326 + $0x48] sm:$0xff]
        %v437 = vld [vmem:[%s326 + $0x50] sm:$0xff]
        %v438 = vld [vmem:[%s326 + $0x58] sm:$0xff]
        %v439 = vld [vmem:[%s326 + $0x60] sm:$0xff]
        %v440 = vld [vmem:[%s326 + $0x68] sm:$0xff]
        %v441 = vld [vmem:[%s326 + $0x70] sm:$0xff]
        %v442 = vld [vmem:[%s326 + $0x78] sm:$0xff]
        %v443 = vld [vmem:[#allocation6] sm:$0xf]
        %v444 = vld [vmem:[#allocation6 + $0x4] sm:$0xf]
        %v445 = vld [vmem:[#allocation6 + $0x8] sm:$0xf]
        %v446 = vld [vmem:[#allocation6 + $0xc] sm:$0xf]
        %v447 = vld [vmem:[#allocation6 + $0x10] sm:$0xf]
        %v448 = vld [vmem:[#allocation6 + $0x14] sm:$0xf]
        %v449 = vld [vmem:[#allocation6 + $0x18] sm:$0xf]
        %v450 = vld [vmem:[#allocation6 + $0x1c] sm:$0xf]
        %v451 = vld [vmem:[#allocation6 + $0x20] sm:$0xf]
        %v452 = vld [vmem:[#allocation6 + $0x24] sm:$0xf]
        %v453 = vld [vmem:[#allocation6 + $0x28] sm:$0xf]
        %v454 = vld [vmem:[#allocation6 + $0x2c] sm:$0xf]
        %v455 = vld [vmem:[#allocation6 + $0x30] sm:$0xf]
        %v456 = vld [vmem:[#allocation6 + $0x34] sm:$0xf]
        %v457 = vld [vmem:[#allocation6 + $0x38] sm:$0xf]
        %v458 = vld [vmem:[#allocation6 + $0x3c] sm:$0xf]
        %v459 = vld [vmem:[#allocation6 + $0x40] sm:$0xf]
        %v460 = vld [vmem:[#allocation6 + $0x44] sm:$0xf]
        %v461 = vld [vmem:[#allocation6 + $0x48] sm:$0xf]
        %v462 = vld [vmem:[#allocation6 + $0x4c] sm:$0xf]
        %v463 = vld [vmem:[#allocation6 + $0x50] sm:$0xf]
        %v464 = vld [vmem:[#allocation6 + $0x54] sm:$0xf]
        %v465 = vld [vmem:[#allocation6 + $0x58] sm:$0xf]
        %v466 = vld [vmem:[#allocation6 + $0x5c] sm:$0xf]
        %v467 = vld [vmem:[#allocation6 + $0x60] sm:$0xf]
        %v468 = vld [vmem:[#allocation6 + $0x64] sm:$0xf]
        %v469 = vld [vmem:[#allocation6 + $0x68] sm:$0xf]
        %v470 = vld [vmem:[#allocation6 + $0x6c] sm:$0xf]
        %v471 = vld [vmem:[#allocation6 + $0x70] sm:$0xf]
        %v472 = vld [vmem:[#allocation6 + $0x74] sm:$0xf]
        %v473 = vld [vmem:[#allocation6 + $0x78] sm:$0xf]
        %v474 = vld [vmem:[#allocation6 + $0x7c] sm:$0xf]
        %v491 = vunpack.c.l.b16 %v427
        %v492 = vunpack.c.h.b16 %v427
        %v493 = vunpack.c.l.b16 %v428
        %v494 = vunpack.c.h.b16 %v428
        %v495 = vunpack.c.l.b16 %v429
        %v496 = vunpack.c.h.b16 %v429
        %v497 = vunpack.c.l.b16 %v430
        %v498 = vunpack.c.h.b16 %v430
        %v499 = vunpack.c.l.b16 %v431
        %v500 = vunpack.c.h.b16 %v431
        %v501 = vunpack.c.l.b16 %v432
        %v502 = vunpack.c.h.b16 %v432
        %v503 = vunpack.c.l.b16 %v433
        %v504 = vunpack.c.h.b16 %v433
        %v505 = vunpack.c.l.b16 %v434
        %v506 = vunpack.c.h.b16 %v434
        %v507 = vunpack.c.l.b16 %v435
        %v508 = vunpack.c.h.b16 %v435
        %v509 = vunpack.c.l.b16 %v436
        %v510 = vunpack.c.h.b16 %v436
        %v511 = vunpack.c.l.b16 %v437
        %v512 = vunpack.c.h.b16 %v437
        %v513 = vunpack.c.l.b16 %v438
        %v514 = vunpack.c.h.b16 %v438
        %v515 = vunpack.c.l.b16 %v439
        %v516 = vunpack.c.h.b16 %v439
        %v517 = vunpack.c.l.b16 %v440
        %v518 = vunpack.c.h.b16 %v440
        %v519 = vunpack.c.l.b16 %v441
        %v520 = vunpack.c.h.b16 %v441
        %v521 = vunpack.c.l.b16 %v442
        %v522 = vunpack.c.h.b16 %v442
        %v523 = vpack.c.b16 %v493, %v491
        %v524 = vpack.c.b16 %v494, %v492
        %v525 = vpack.c.b16 %v497, %v495
        %v526 = vpack.c.b16 %v498, %v496
        %v527 = vpack.c.b16 %v501, %v499
        %v528 = vpack.c.b16 %v502, %v500
        %v529 = vpack.c.b16 %v505, %v503
        %v530 = vpack.c.b16 %v506, %v504
        %v531 = vpack.c.b16 %v509, %v507
        %v532 = vpack.c.b16 %v510, %v508
        %v533 = vpack.c.b16 %v513, %v511
        %v534 = vpack.c.b16 %v514, %v512
        %v535 = vpack.c.b16 %v517, %v515
        %v536 = vpack.c.b16 %v518, %v516
        %v537 = vpack.c.b16 %v521, %v519
        %v538 = vpack.c.b16 %v522, %v520
        %v587 = vunpack.c.l.b16 %v443
        %v588 = vunpack.c.l.b16 %v444
        %v589 = vunpack.c.l.b16 %v445
        %v590 = vunpack.c.l.b16 %v446
        %v591 = vunpack.c.l.b16 %v447
        %v592 = vunpack.c.l.b16 %v448
        %v593 = vunpack.c.l.b16 %v449
        %v594 = vunpack.c.l.b16 %v450
        %v595 = vunpack.c.l.b16 %v451
        %v596 = vunpack.c.l.b16 %v452
        %v597 = vunpack.c.l.b16 %v453
        %v598 = vunpack.c.l.b16 %v454
        %v599 = vunpack.c.l.b16 %v455
        %v600 = vunpack.c.l.b16 %v456
        %v601 = vunpack.c.l.b16 %v457
        %v602 = vunpack.c.l.b16 %v458
        %v603 = vunpack.c.l.b16 %v459
        %v604 = vunpack.c.l.b16 %v460
        %v605 = vunpack.c.l.b16 %v461
        %v606 = vunpack.c.l.b16 %v462
        %v607 = vunpack.c.l.b16 %v463
        %v608 = vunpack.c.l.b16 %v464
        %v609 = vunpack.c.l.b16 %v465
        %v610 = vunpack.c.l.b16 %v466
        %v611 = vunpack.c.l.b16 %v467
        %v612 = vunpack.c.l.b16 %v468
        %v613 = vunpack.c.l.b16 %v469
        %v614 = vunpack.c.l.b16 %v470
        %v615 = vunpack.c.l.b16 %v471
        %v616 = vunpack.c.l.b16 %v472
        %v617 = vunpack.c.l.b16 %v473
        %v618 = vunpack.c.l.b16 %v474
        %v619 = vpack.c.b16 %v588, %v587
        %v620 = vpack.c.b16 %v590, %v589
        %v621 = vpack.c.b16 %v592, %v591
        %v622 = vpack.c.b16 %v594, %v593
        %v623 = vpack.c.b16 %v596, %v595
        %v624 = vpack.c.b16 %v598, %v597
        %v625 = vpack.c.b16 %v600, %v599
        %v626 = vpack.c.b16 %v602, %v601
        %v627 = vpack.c.b16 %v604, %v603
        %v628 = vpack.c.b16 %v606, %v605
        %v629 = vpack.c.b16 %v608, %v607
        %v630 = vpack.c.b16 %v610, %v609
        %v631 = vpack.c.b16 %v612, %v611
        %v632 = vpack.c.b16 %v614, %v613
        %v633 = vpack.c.b16 %v616, %v615
        %v634 = vpack.c.b16 %v618, %v617
        %651 = vmatpush.bf16.msra.mxu0 %v626
        %652 = vmatpush.bf16.msra.mxu0 %v625
        %653 = vmatpush.bf16.msra.mxu0 %v624
        %654 = vmatpush.bf16.msra.mxu0 %v623
        %655 = vmatpush.bf16.msra.mxu0 %v622
        %656 = vmatpush.bf16.msra.mxu0 %v621
        %657 = vmatpush.bf16.msra.mxu0 %v620
        %658 = vmatpush.bf16.msra.mxu0 %v619
        %659 = vmatmul.bf16.gmra.mxu0 %v523
        %v660 = vpop.f32.mrf.mxu0
        %v661 = vadd.f32 0.0, %v660
        %v662 = vpop.f32.mrf.mxu0
        %v663 = vadd.f32 0.0, %v662
        %664 = vmatmul.bf16.gmra.mxu0 %v525
        %v665 = vpop.f32.mrf.mxu0
        %v666 = vadd.f32 0.0, %v665
        %v667 = vpop.f32.mrf.mxu0
        %v668 = vadd.f32 0.0, %v667
        %669 = vmatmul.bf16.gmra.mxu0 %v527
        %v670 = vpop.f32.mrf.mxu0
        %v671 = vadd.f32 0.0, %v670
        %v672 = vpop.f32.mrf.mxu0
        %v673 = vadd.f32 0.0, %v672
        %674 = vmatmul.bf16.gmra.mxu0 %v529
        %v675 = vpop.f32.mrf.mxu0
        %v676 = vadd.f32 0.0, %v675
        %v677 = vpop.f32.mrf.mxu0
        %v678 = vadd.f32 0.0, %v677
        %679 = vmatmul.bf16.gmra.mxu0 %v531
        %v680 = vpop.f32.mrf.mxu0
        %v681 = vadd.f32 0.0, %v680
        %v682 = vpop.f32.mrf.mxu0
        %v683 = vadd.f32 0.0, %v682
        %684 = vmatmul.bf16.gmra.mxu0 %v533
        %v685 = vpop.f32.mrf.mxu0
        %v686 = vadd.f32 0.0, %v685
        %v687 = vpop.f32.mrf.mxu0
        %v688 = vadd.f32 0.0, %v687
        %689 = vmatmul.bf16.gmra.mxu0 %v535
        %v690 = vpop.f32.mrf.mxu0
        %v691 = vadd.f32 0.0, %v690
        %v692 = vpop.f32.mrf.mxu0
        %v693 = vadd.f32 0.0, %v692
        %694 = vmatmul.bf16.gmra.mxu0 %v537
        %v695 = vpop.f32.mrf.mxu0
        %v696 = vadd.f32 0.0, %v695
        %v697 = vpop.f32.mrf.mxu0
        %v698 = vadd.f32 0.0, %v697
        %699 = vdwg.mxu0
        %700 = vmatpush.bf16.msra.mxu0 %v634
        %701 = vmatpush.bf16.msra.mxu0 %v633
        %702 = vmatpush.bf16.msra.mxu0 %v632
        %703 = vmatpush.bf16.msra.mxu0 %v631
        %704 = vmatpush.bf16.msra.mxu0 %v630
        %705 = vmatpush.bf16.msra.mxu0 %v629
        %706 = vmatpush.bf16.msra.mxu0 %v628
        %707 = vmatpush.bf16.msra.mxu0 %v627
        %708 = vmatmul.bf16.gmra.mxu0 %v524
        %v709 = vpop.f32.mrf.mxu0
        %v710 = vadd.f32 %v661, %v709
        %v711 = vpop.f32.mrf.mxu0
        %v712 = vadd.f32 %v663, %v711
        %713 = vmatmul.bf16.gmra.mxu0 %v526
        %v714 = vpop.f32.mrf.mxu0
        %v715 = vadd.f32 %v666, %v714
        %v716 = vpop.f32.mrf.mxu0
        %v717 = vadd.f32 %v668, %v716
        %718 = vmatmul.bf16.gmra.mxu0 %v528
        %v719 = vpop.f32.mrf.mxu0
        %v720 = vadd.f32 %v671, %v719
        %v721 = vpop.f32.mrf.mxu0
        %v722 = vadd.f32 %v673, %v721
        %723 = vmatmul.bf16.gmra.mxu0 %v530
        %v724 = vpop.f32.mrf.mxu0
        %v725 = vadd.f32 %v676, %v724
        %v726 = vpop.f32.mrf.mxu0
        %v727 = vadd.f32 %v678, %v726
        %728 = vmatmul.bf16.gmra.mxu0 %v532
        %v729 = vpop.f32.mrf.mxu0
        %v730 = vadd.f32 %v681, %v729
        %v731 = vpop.f32.mrf.mxu0
        %v732 = vadd.f32 %v683, %v731
        %733 = vmatmul.bf16.gmra.mxu0 %v534
        %v734 = vpop.f32.mrf.mxu0
        %v735 = vadd.f32 %v686, %v734
        %v736 = vpop.f32.mrf.mxu0
        %v737 = vadd.f32 %v688, %v736
        %738 = vmatmul.bf16.gmra.mxu0 %v536
        %v739 = vpop.f32.mrf.mxu0
        %v740 = vadd.f32 %v691, %v739
        %v741 = vpop.f32.mrf.mxu0
        %v742 = vadd.f32 %v693, %v741
        %743 = vmatmul.bf16.gmra.mxu0 %v538
        %v744 = vpop.f32.mrf.mxu0
        %v745 = vadd.f32 %v696, %v744
        %v746 = vpop.f32.mrf.mxu0
        %v747 = vadd.f32 %v698, %v746
        %748 = vdwg.mxu0
        %v749 = vadd.f32 %v411, %v710
        %v750 = vadd.f32 %v412, %v712
        %v751 = vadd.f32 %v413, %v715
        %v752 = vadd.f32 %v414, %v717
        %v753 = vadd.f32 %v415, %v720
        %v754 = vadd.f32 %v416, %v722
        %v755 = vadd.f32 %v417, %v725
        %v756 = vadd.f32 %v418, %v727
        %v757 = vadd.f32 %v419, %v730
        %v758 = vadd.f32 %v420, %v732
        %v759 = vadd.f32 %v421, %v735
        %v760 = vadd.f32 %v422, %v737
        %v761 = vadd.f32 %v423, %v740
        %v762 = vadd.f32 %v424, %v742
        %v763 = vadd.f32 %v425, %v745
        %v764 = vadd.f32 %v426, %v747
        %765 = vst [vmem:[#allocation2] sm:$0xff] %v749
        %766 = vst [vmem:[#allocation2 + $0x8] sm:$0xff] %v750
        %767 = vst [vmem:[#allocation2 + $0x10] sm:$0xff] %v751
        %768 = vst [vmem:[#allocation2 + $0x18] sm:$0xff] %v752
        %769 = vst [vmem:[#allocation2 + $0x20] sm:$0xff] %v753
        %770 = vst [vmem:[#allocation2 + $0x28] sm:$0xff] %v754
        %771 = vst [vmem:[#allocation2 + $0x30] sm:$0xff] %v755
        %772 = vst [vmem:[#allocation2 + $0x38] sm:$0xff] %v756
        %773 = vst [vmem:[#allocation2 + $0x40] sm:$0xff] %v757
        %774 = vst [vmem:[#allocation2 + $0x48] sm:$0xff] %v758
        %775 = vst [vmem:[#allocation2 + $0x50] sm:$0xff] %v759
        %776 = vst [vmem:[#allocation2 + $0x58] sm:$0xff] %v760
        %777 = vst [vmem:[#allocation2 + $0x60] sm:$0xff] %v761
        %778 = vst [vmem:[#allocation2 + $0x68] sm:$0xff] %v762
        %779 = vst [vmem:[#allocation2 + $0x70] sm:$0xff] %v763
        %780 = vst [vmem:[#allocation2 + $0x78] sm:$0xff] %v764
        // Predicated region
        $region69: #{tpu_custom_call.1} parent=43 // pred_check
          %p781 = pneg %p391
        $region70: #{tpu_custom_call.1} parent=43 // pred_check_branch
          %783 = sbr.rel (%p781) target = $region72
        $region71: #{tpu_custom_call.1} parent=43 // pred_region
          %v784 = vld [vmem:[%s341] sm:$0xf]
          %v785 = vld [vmem:[%s341 + $0x4] sm:$0xf]
          %v786 = vld [vmem:[%s341 + $0x8] sm:$0xf]
          %v787 = vld [vmem:[%s341 + $0xc] sm:$0xf]
          %v788 = vld [vmem:[%s341 + $0x10] sm:$0xf]
          %v789 = vld [vmem:[%s341 + $0x14] sm:$0xf]
          %v790 = vld [vmem:[%s341 + $0x18] sm:$0xf]
          %v791 = vld [vmem:[%s341 + $0x1c] sm:$0xf]
          %v792 = vld [vmem:[%s341 + $0x20] sm:$0xf]
          %v793 = vld [vmem:[%s341 + $0x24] sm:$0xf]
          %v794 = vld [vmem:[%s341 + $0x28] sm:$0xf]
          %v795 = vld [vmem:[%s341 + $0x2c] sm:$0xf]
          %v796 = vld [vmem:[%s341 + $0x30] sm:$0xf]
          %v797 = vld [vmem:[%s341 + $0x34] sm:$0xf]
          %v798 = vld [vmem:[%s341 + $0x38] sm:$0xf]
          %v799 = vld [vmem:[%s341 + $0x3c] sm:$0xf]
          %v800 = vld [vmem:[#allocation9] sm:$0xf]
          %v801 = vld [vmem:[#allocation9 + $0x4] sm:$0xf]
          %v802 = vld [vmem:[#allocation9 + $0x8] sm:$0xf]
          %v803 = vld [vmem:[#allocation9 + $0xc] sm:$0xf]
          %v804 = vld [vmem:[#allocation9 + $0x10] sm:$0xf]
          %v805 = vld [vmem:[#allocation9 + $0x14] sm:$0xf]
          %v806 = vld [vmem:[#allocation9 + $0x18] sm:$0xf]
          %v807 = vld [vmem:[#allocation9 + $0x1c] sm:$0xf]
          %v808 = vld [vmem:[#allocation9 + $0x20] sm:$0xf]
          %v809 = vld [vmem:[#allocation9 + $0x24] sm:$0xf]
          %v810 = vld [vmem:[#allocation9 + $0x28] sm:$0xf]
          %v811 = vld [vmem:[#allocation9 + $0x2c] sm:$0xf]
          %v812 = vld [vmem:[#allocation9 + $0x30] sm:$0xf]
          %v813 = vld [vmem:[#allocation9 + $0x34] sm:$0xf]
          %v814 = vld [vmem:[#allocation9 + $0x38] sm:$0xf]
          %v815 = vld [vmem:[#allocation9 + $0x3c] sm:$0xf]
          %v816 = vld [vmem:[#allocation2] sm:$0xff]
          %v817 = vld [vmem:[#allocation2 + $0x8] sm:$0xff]
          %v818 = vld [vmem:[#allocation2 + $0x10] sm:$0xff]
          %v819 = vld [vmem:[#allocation2 + $0x18] sm:$0xff]
          %v820 = vld [vmem:[#allocation2 + $0x20] sm:$0xff]
          %v821 = vld [vmem:[#allocation2 + $0x28] sm:$0xff]
          %v822 = vld [vmem:[#allocation2 + $0x30] sm:$0xff]
          %v823 = vld [vmem:[#allocation2 + $0x38] sm:$0xff]
          %v824 = vld [vmem:[#allocation2 + $0x40] sm:$0xff]
          %v825 = vld [vmem:[#allocation2 + $0x48] sm:$0xff]
          %v826 = vld [vmem:[#allocation2 + $0x50] sm:$0xff]
          %v827 = vld [vmem:[#allocation2 + $0x58] sm:$0xff]
          %v828 = vld [vmem:[#allocation2 + $0x60] sm:$0xff]
          %v829 = vld [vmem:[#allocation2 + $0x68] sm:$0xff]
          %v830 = vld [vmem:[#allocation2 + $0x70] sm:$0xff]
          %v831 = vld [vmem:[#allocation2 + $0x78] sm:$0xff]
          %v832 = vpack.c.bf16 %v817, %v816
          %v833 = vpack.c.bf16 %v819, %v818
          %v834 = vpack.c.bf16 %v821, %v820
          %v835 = vpack.c.bf16 %v823, %v822
          %v836 = vpack.c.bf16 %v825, %v824
          %v837 = vpack.c.bf16 %v827, %v826
          %v838 = vpack.c.bf16 %v829, %v828
          %v839 = vpack.c.bf16 %v831, %v830
          %v840 = vld [vmem:[#allocation10] sm:$0xf]
          %v841 = vld [vmem:[#allocation10 + $0x4] sm:$0xf]
          %v842 = vld [vmem:[#allocation10 + $0x8] sm:$0xf]
          %v843 = vld [vmem:[#allocation10 + $0xc] sm:$0xf]
          %v844 = vld [vmem:[#allocation10 + $0x10] sm:$0xf]
          %v845 = vld [vmem:[#allocation10 + $0x14] sm:$0xf]
          %v846 = vld [vmem:[#allocation10 + $0x18] sm:$0xf]
          %v847 = vld [vmem:[#allocation10 + $0x1c] sm:$0xf]
          %v848 = vld [vmem:[#allocation10 + $0x20] sm:$0xf]
          %v849 = vld [vmem:[#allocation10 + $0x24] sm:$0xf]
          %v850 = vld [vmem:[#allocation10 + $0x28] sm:$0xf]
          %v851 = vld [vmem:[#allocation10 + $0x2c] sm:$0xf]
          %v852 = vld [vmem:[#allocation10 + $0x30] sm:$0xf]
          %v853 = vld [vmem:[#allocation10 + $0x34] sm:$0xf]
          %v854 = vld [vmem:[#allocation10 + $0x38] sm:$0xf]
          %v855 = vld [vmem:[#allocation10 + $0x3c] sm:$0xf]
          %v872 = vunpack.c.l.b16 %v840
          %v873 = vunpack.c.l.b16 %v841
          %v874 = vunpack.c.l.b16 %v842
          %v875 = vunpack.c.l.b16 %v843
          %v876 = vunpack.c.l.b16 %v844
          %v877 = vunpack.c.l.b16 %v845
          %v878 = vunpack.c.l.b16 %v846
          %v879 = vunpack.c.l.b16 %v847
          %v880 = vunpack.c.l.b16 %v848
          %v881 = vunpack.c.l.b16 %v849
          %v882 = vunpack.c.l.b16 %v850
          %v883 = vunpack.c.l.b16 %v851
          %v884 = vunpack.c.l.b16 %v852
          %v885 = vunpack.c.l.b16 %v853
          %v886 = vunpack.c.l.b16 %v854
          %v887 = vunpack.c.l.b16 %v855
          %v888 = vpack.c.b16 %v873, %v872
          %v889 = vpack.c.b16 %v875, %v874
          %v890 = vpack.c.b16 %v877, %v876
          %v891 = vpack.c.b16 %v879, %v878
          %v892 = vpack.c.b16 %v881, %v880
          %v893 = vpack.c.b16 %v883, %v882
          %v894 = vpack.c.b16 %v885, %v884
          %v895 = vpack.c.b16 %v887, %v886
          %904 = vmatpush.bf16.msra.mxu0 %v895
          %905 = vmatpush.bf16.msra.mxu0 %v894
          %906 = vmatpush.bf16.msra.mxu0 %v893
          %907 = vmatpush.bf16.msra.mxu0 %v892
          %908 = vmatpush.bf16.msra.mxu0 %v891
          %909 = vmatpush.bf16.msra.mxu0 %v890
          %910 = vmatpush.bf16.msra.mxu0 %v889
          %911 = vmatpush.bf16.msra.mxu0 %v888
          %912 = vmatmul.bf16.gmra.mxu0 %v832
          %v913 = vpop.f32.mrf.mxu0
          %v914 = vadd.f32 0.0, %v913
          %v915 = vpop.f32.mrf.mxu0
          %v916 = vadd.f32 0.0, %v915
          %917 = vmatmul.bf16.gmra.mxu0 %v833
          %v918 = vpop.f32.mrf.mxu0
          %v919 = vadd.f32 0.0, %v918
          %v920 = vpop.f32.mrf.mxu0
          %v921 = vadd.f32 0.0, %v920
          %922 = vmatmul.bf16.gmra.mxu0 %v834
          %v923 = vpop.f32.mrf.mxu0
          %v924 = vadd.f32 0.0, %v923
          %v925 = vpop.f32.mrf.mxu0
          %v926 = vadd.f32 0.0, %v925
          %927 = vmatmul.bf16.gmra.mxu0 %v835
          %v928 = vpop.f32.mrf.mxu0
          %v929 = vadd.f32 0.0, %v928
          %v930 = vpop.f32.mrf.mxu0
          %v931 = vadd.f32 0.0, %v930
          %932 = vmatmul.bf16.gmra.mxu0 %v836
          %v933 = vpop.f32.mrf.mxu0
          %v934 = vadd.f32 0.0, %v933
          %v935 = vpop.f32.mrf.mxu0
          %v936 = vadd.f32 0.0, %v935
          %937 = vmatmul.bf16.gmra.mxu0 %v837
          %v938 = vpop.f32.mrf.mxu0
          %v939 = vadd.f32 0.0, %v938
          %v940 = vpop.f32.mrf.mxu0
          %v941 = vadd.f32 0.0, %v940
          %942 = vmatmul.bf16.gmra.mxu0 %v838
          %v943 = vpop.f32.mrf.mxu0
          %v944 = vadd.f32 0.0, %v943
          %v945 = vpop.f32.mrf.mxu0
          %v946 = vadd.f32 0.0, %v945
          %947 = vmatmul.bf16.gmra.mxu0 %v839
          %v948 = vpop.f32.mrf.mxu0
          %v949 = vadd.f32 0.0, %v948
          %v950 = vpop.f32.mrf.mxu0
          %v951 = vadd.f32 0.0, %v950
          %952 = vdwg.mxu0
          %v969 = vunpack.c.l.b16 %v784
          %v970 = vunpack.c.l.b16 %v785
          %v971 = vunpack.c.l.b16 %v786
          %v972 = vunpack.c.l.b16 %v787
          %v973 = vunpack.c.l.b16 %v788
          %v974 = vunpack.c.l.b16 %v789
          %v975 = vunpack.c.l.b16 %v790
          %v976 = vunpack.c.l.b16 %v791
          %v977 = vunpack.c.l.b16 %v792
          %v978 = vunpack.c.l.b16 %v793
          %v979 = vunpack.c.l.b16 %v794
          %v980 = vunpack.c.l.b16 %v795
          %v981 = vunpack.c.l.b16 %v796
          %v982 = vunpack.c.l.b16 %v797
          %v983 = vunpack.c.l.b16 %v798
          %v984 = vunpack.c.l.b16 %v799
          %v985 = vpack.c.b16 %v970, %v969
          %v986 = vpack.c.b16 %v972, %v971
          %v987 = vpack.c.b16 %v974, %v973
          %v988 = vpack.c.b16 %v976, %v975
          %v989 = vpack.c.b16 %v978, %v977
          %v990 = vpack.c.b16 %v980, %v979
          %v991 = vpack.c.b16 %v982, %v981
          %v992 = vpack.c.b16 %v984, %v983
          %v1017 = vunpack.c.l.b16 %v800
          %v1018 = vunpack.c.l.b16 %v801
          %v1019 = vunpack.c.l.b16 %v802
          %v1020 = vunpack.c.l.b16 %v803
          %v1021 = vunpack.c.l.b16 %v804
          %v1022 = vunpack.c.l.b16 %v805
          %v1023 = vunpack.c.l.b16 %v806
          %v1024 = vunpack.c.l.b16 %v807
          %v1025 = vunpack.c.l.b16 %v808
          %v1026 = vunpack.c.l.b16 %v809
          %v1027 = vunpack.c.l.b16 %v810
          %v1028 = vunpack.c.l.b16 %v811
          %v1029 = vunpack.c.l.b16 %v812
          %v1030 = vunpack.c.l.b16 %v813
          %v1031 = vunpack.c.l.b16 %v814
          %v1032 = vunpack.c.l.b16 %v815
          %v1033 = vpack.c.b16 %v1018, %v1017
          %v1034 = vpack.c.b16 %v1020, %v1019
          %v1035 = vpack.c.b16 %v1022, %v1021
          %v1036 = vpack.c.b16 %v1024, %v1023
          %v1037 = vpack.c.b16 %v1026, %v1025
          %v1038 = vpack.c.b16 %v1028, %v1027
          %v1039 = vpack.c.b16 %v1030, %v1029
          %v1040 = vpack.c.b16 %v1032, %v1031
          %1049 = vmatpush.bf16.msra.mxu0 %v1040
          %1050 = vmatpush.bf16.msra.mxu0 %v1039
          %1051 = vmatpush.bf16.msra.mxu0 %v1038
          %1052 = vmatpush.bf16.msra.mxu0 %v1037
          %1053 = vmatpush.bf16.msra.mxu0 %v1036
          %1054 = vmatpush.bf16.msra.mxu0 %v1035
          %1055 = vmatpush.bf16.msra.mxu0 %v1034
          %1056 = vmatpush.bf16.msra.mxu0 %v1033
          %1057 = vmatmul.bf16.gmra.mxu0 %v985
          %v1058 = vpop.f32.mrf.mxu0
          %v1059 = vadd.f32 %v914, %v1058
          %v1060 = vpop.f32.mrf.mxu0
          %v1061 = vadd.f32 %v916, %v1060
          %1062 = vmatmul.bf16.gmra.mxu0 %v986
          %v1063 = vpop.f32.mrf.mxu0
          %v1064 = vadd.f32 %v919, %v1063
          %v1065 = vpop.f32.mrf.mxu0
          %v1066 = vadd.f32 %v921, %v1065
          %1067 = vmatmul.bf16.gmra.mxu0 %v987
          %v1068 = vpop.f32.mrf.mxu0
          %v1069 = vadd.f32 %v924, %v1068
          %v1070 = vpop.f32.mrf.mxu0
          %v1071 = vadd.f32 %v926, %v1070
          %1072 = vmatmul.bf16.gmra.mxu0 %v988
          %v1073 = vpop.f32.mrf.mxu0
          %v1074 = vadd.f32 %v929, %v1073
          %v1075 = vpop.f32.mrf.mxu0
          %v1076 = vadd.f32 %v931, %v1075
          %1077 = vmatmul.bf16.gmra.mxu0 %v989
          %v1078 = vpop.f32.mrf.mxu0
          %v1079 = vadd.f32 %v934, %v1078
          %v1080 = vpop.f32.mrf.mxu0
          %v1081 = vadd.f32 %v936, %v1080
          %1082 = vmatmul.bf16.gmra.mxu0 %v990
          %v1083 = vpop.f32.mrf.mxu0
          %v1084 = vadd.f32 %v939, %v1083
          %v1085 = vpop.f32.mrf.mxu0
          %v1086 = vadd.f32 %v941, %v1085
          %1087 = vmatmul.bf16.gmra.mxu0 %v991
          %v1088 = vpop.f32.mrf.mxu0
          %v1089 = vadd.f32 %v944, %v1088
          %v1090 = vpop.f32.mrf.mxu0
          %v1091 = vadd.f32 %v946, %v1090
          %1092 = vmatmul.bf16.gmra.mxu0 %v992
          %v1093 = vpop.f32.mrf.mxu0
          %v1094 = vadd.f32 %v949, %v1093
          %v1095 = vpop.f32.mrf.mxu0
          %v1096 = vadd.f32 %v951, %v1095
          %1097 = vdwg.mxu0
          %v1098 = vld [vmem:[%s5] sm:$0x1]
          %v1100 = vperm.slane %v1098, 0
          %v1102 = vadd.f32 %v1059, %v1100
          %v1103 = vadd.f32 %v1061, %v1100
          %v1104 = vadd.f32 %v1064, %v1100
          %v1105 = vadd.f32 %v1066, %v1100
          %v1106 = vadd.f32 %v1069, %v1100
          %v1107 = vadd.f32 %v1071, %v1100
          %v1108 = vadd.f32 %v1074, %v1100
          %v1109 = vadd.f32 %v1076, %v1100
          %v1110 = vadd.f32 %v1079, %v1100
          %v1111 = vadd.f32 %v1081, %v1100
          %v1112 = vadd.f32 %v1084, %v1100
          %v1113 = vadd.f32 %v1086, %v1100
          %v1114 = vadd.f32 %v1089, %v1100
          %v1115 = vadd.f32 %v1091, %v1100
          %v1116 = vadd.f32 %v1094, %v1100
          %v1117 = vadd.f32 %v1096, %v1100
          %v1118 = vmax.f32 %v1102, 0.0
          %v1119 = vmax.f32 %v1103, 0.0
          %v1120 = vmax.f32 %v1104, 0.0
          %v1121 = vmax.f32 %v1105, 0.0
          %v1122 = vmax.f32 %v1106, 0.0
          %v1123 = vmax.f32 %v1107, 0.0
          %v1124 = vmax.f32 %v1108, 0.0
          %v1125 = vmax.f32 %v1109, 0.0
          %v1126 = vmax.f32 %v1110, 0.0
          %v1127 = vmax.f32 %v1111, 0.0
          %v1128 = vmax.f32 %v1112, 0.0
          %v1129 = vmax.f32 %v1113, 0.0
          %v1130 = vmax.f32 %v1114, 0.0
          %v1131 = vmax.f32 %v1115, 0.0
          %v1132 = vmax.f32 %v1116, 0.0
          %v1133 = vmax.f32 %v1117, 0.0
          %v1134 = vpack.c.bf16 %v1118, %v1118
          %v1135 = vpack.c.bf16 %v1119, %v1119
          %v1136 = vpack.c.bf16 %v1120, %v1120
          %v1137 = vpack.c.bf16 %v1121, %v1121
          %v1138 = vpack.c.bf16 %v1122, %v1122
          %v1139 = vpack.c.bf16 %v1123, %v1123
          %v1140 = vpack.c.bf16 %v1124, %v1124
          %v1141 = vpack.c.bf16 %v1125, %v1125
          %v1142 = vpack.c.bf16 %v1126, %v1126
          %v1143 = vpack.c.bf16 %v1127, %v1127
          %v1144 = vpack.c.bf16 %v1128, %v1128
          %v1145 = vpack.c.bf16 %v1129, %v1129
          %v1146 = vpack.c.bf16 %v1130, %v1130
          %v1147 = vpack.c.bf16 %v1131, %v1131
          %v1148 = vpack.c.bf16 %v1132, %v1132
          %v1149 = vpack.c.bf16 %v1133, %v1133
          %1150 = vst [vmem:[%s385] sm:$0xf] %v1134
          %1151 = vst [vmem:[%s385 + $0x4] sm:$0xf] %v1135
          %1152 = vst [vmem:[%s385 + $0x8] sm:$0xf] %v1136
          %1153 = vst [vmem:[%s385 + $0xc] sm:$0xf] %v1137
          %1154 = vst [vmem:[%s385 + $0x10] sm:$0xf] %v1138
          %1155 = vst [vmem:[%s385 + $0x14] sm:$0xf] %v1139
          %1156 = vst [vmem:[%s385 + $0x18] sm:$0xf] %v1140
          %1157 = vst [vmem:[%s385 + $0x1c] sm:$0xf] %v1141
          %1158 = vst [vmem:[%s385 + $0x20] sm:$0xf] %v1142
          %1159 = vst [vmem:[%s385 + $0x24] sm:$0xf] %v1143
          %1160 = vst [vmem:[%s385 + $0x28] sm:$0xf] %v1144
          %1161 = vst [vmem:[%s385 + $0x2c] sm:$0xf] %v1145
          %1162 = vst [vmem:[%s385 + $0x30] sm:$0xf] %v1146
          %1163 = vst [vmem:[%s385 + $0x34] sm:$0xf] %v1147
          %1164 = vst [vmem:[%s385 + $0x38] sm:$0xf] %v1148
          %1165 = vst [vmem:[%s385 + $0x3c] sm:$0xf] %v1149
        $region72: #{tpu_custom_call.1} parent=43 // pred_fallthru
          _
        %s1166 = sand.u32 %s188, 1
        %s1167 = scalar_lea.sflag [#allocation5], %s1166
        %s1168 = sand.u32 %s188, 1
        %s1169 = smul.addr %s1168, 64
        %s1170 = scalar_lea.vmem [#allocation12], %s1169
        // Predicated region
        $region73: #{tpu_custom_call.1} parent=43 // pred_check
          %p1171 = pneg %p198
        $region74: #{tpu_custom_call.1} parent=43 // pred_check_branch
          %1173 = sbr.rel (%p1171) target = $region76
        $region75: #{tpu_custom_call.1} parent=43 // pred_region
          %s1174 = smul.u32 16, %s29
          %1176 = vsyncadd %s1167, 0
          %s1177 = smul.addr %s1174, 4
          %s1178 = scalar_lea.hbm %s6, %s1177
          %s1179 = sshll.u32 %s1170, 4
          %s1180 = int_to_ptr.vmem [resolvable:$true] %s1179
          %s1181 = sshll.u32 %s1178, 4
          %s1182 = int_to_ptr.hbm [resolvable:$true] %s1181
          %1187 = dma.vmem_to_hbm [thread:$0]  %s1180, 1024, %s1182, %s1167, 64, 64, 4
        $region76: #{tpu_custom_call.1} parent=43 // pred_fallthru
          _
      $region44: #{tpu_custom_call.1} parent=5 // pred_fallthru
        _
      %p1188 = scmp.le.s32.totalorder 2, %s20
      // Predicated region
      $region77: #{tpu_custom_call.1} parent=5 // pred_check
        %p1189 = pneg %p1188
      $region78: #{tpu_custom_call.1} parent=5 // pred_check_branch
        %1191 = sbr.rel (%p1189) target = $region80
      $region79: #{tpu_custom_call.1} parent=5 // pred_region
        %s1192 = ssub.s32 %s20, 2
        // Predicated region
        $region81: #{tpu_custom_call.1} parent=79 // pred_check
          %p1193 = pneg %p204
        $region82: #{tpu_custom_call.1} parent=79 // pred_check_branch
          %1195 = sbr.rel (%p1193) target = $region84
        $region83: #{tpu_custom_call.1} parent=79 // pred_region
          %s1196 = sand.u32 %s189, 1
          %s1197 = scalar_lea.sflag [#allocation5], %s1196
          %s1198 = sand.u32 %s189, 1
          %s1199 = smul.addr %s1198, 64
          %s1200 = scalar_lea.vmem [#allocation12], %s1199
          %1202 = dma.done %s1197, 1024
        $region84: #{tpu_custom_call.1} parent=79 // pred_fallthru
          _
      $region80: #{tpu_custom_call.1} parent=5 // pred_fallthru
        _
    $region6: #{tpu_custom_call.1} parent=1 // loop_footer
      %s24 = sadd.s32 1, %s20
    $region7: #{tpu_custom_call.1} parent=1 // loop_footer_branch
      %19 = sbr.rel target = $region3
    $region8: #{tpu_custom_call.1} parent=1 // loop_exit
      _
    %1203 = vsyncpa [#allocation4], 1
    %s1204 = scalar_lea.sflag [#allocation4], 1
    %1205 = vsyncpa %s1204, 1
    %1206 = vsyncpa [#allocation7], 1
    %1207 = vsyncpa [#allocation11], 1
    %1208 = vsyncpa [#allocation5], 1
    %s1209 = scalar_lea.sflag [#allocation5], 1
    %1210 = vsyncpa %s1209, 1

</llo_original>
